<compile_context>
chip_gen: v5e
topology: v5e:2x2
jax: 0.10.0
libtpu: 0.0.40
codegen_flags: <defaults>
</compile_context>

<pallas_src>
import functools

import jax
import jax.numpy as jnp
from jax.experimental import pallas as pl
from jax.experimental.pallas import tpu as pltpu

BN_EPS = 1e-5
LANE = 128


def _round_up(x, m):
    return (x + m - 1) // m * m


# ---------- pass 1: GraphConv (fused matmul) + per-tile BN partial stats ----------
def _gconv_stats_kernel(a_ref, xb_ref, xf_ref, w_ref, b_ref, h_ref, stats_ref,
                        *, n_real, tile_m):
    # agg = A_tile @ x  (bf16 operands, f32 accumulation on the MXU)
    agg = jnp.dot(a_ref[...], xb_ref[...], preferred_element_type=jnp.float32)
    # Fused GraphConv: [agg | x_tile] @ [W_rel^T ; W_root^T] + b_rel  (single MXU op)
    z = jnp.concatenate([agg, xf_ref[...]], axis=-1)
    h = jnp.dot(z, w_ref[...], preferred_element_type=jnp.float32) + b_ref[...]
    h_ref[...] = h

    # Partial batch-norm statistics for this row tile (mask padded rows).
    row0 = pl.program_id(0) * tile_m
    rows = jax.lax.broadcasted_iota(jnp.int32, h.shape, 0) + row0
    hm = jnp.where(rows < n_real, h, 0.0)
    s = jnp.sum(hm, axis=0, keepdims=True)            # (1, C_pad)
    ss = jnp.sum(hm * hm, axis=0, keepdims=True)      # (1, C_pad)
    stats_ref[...] = jnp.concatenate([s, ss], axis=0).reshape(stats_ref.shape)


# ---------- pass 2: normalize (scale/shift with gamma folded) + relu + skip + relu ----------
def _bn_relu_skip_kernel(h_ref, x_ref, scale_ref, shift_ref, o_ref):
    out = jnp.maximum(h_ref[...] * scale_ref[...] + shift_ref[...], 0.0)
    o_ref[...] = jnp.maximum(out + x_ref[...], 0.0)


def gblock_forward(adj, x, w_rel, w_root, b_rel, gamma, beta, *, tile_m=None):
    N, C = x.shape
    assert w_rel.shape == (C, C) and w_root.shape == (C, C), "skipcon needs in_ch == out_ch"

    C_pad = _round_up(C, LANE)
    if tile_m is None:
        tile_m = 256 if N >= 256 else _round_up(N, 16)
    N_pad = _round_up(N, tile_m)
    n_tiles = N_pad // tile_m

    # ---- wrapper-side layout plumbing (free): pad to lane-dense shapes,
    #      pre-transpose + stack weights, cast the O(N^2) operands to bf16.
    def pad2(a, r, c):
        return jnp.pad(a, ((0, r - a.shape[0]), (0, c - a.shape[1])))

    adj_bf = pad2(adj.astype(jnp.float32), N_pad, N_pad).astype(jnp.bfloat16)
    x_f32 = pad2(x.astype(jnp.float32), N_pad, C_pad)
    x_bf = x_f32.astype(jnp.bfloat16)
    w_stack = jnp.concatenate([pad2(w_rel.T, C_pad, C_pad),
                               pad2(w_root.T, C_pad, C_pad)], axis=0)   # (2*C_pad, C_pad)
    b_p = pad2(b_rel, 1, C_pad)
    gamma_p = jnp.pad(gamma, ((0, 0), (0, C_pad - C)), constant_values=1.0)
    beta_p = pad2(beta, 1, C_pad)

    # For very large graphs, raise vmem_limit_bytes (v5e/v6e: 128 MiB physical, v7x: 64 MiB).
    params = pltpu.CompilerParams(
        dimension_semantics=("parallel",),            # row tiles shard across TCs (v7x megacore)
        vmem_limit_bytes=32 * 1024 * 1024)

    # ---- pass 1: GraphConv + per-tile BN partial sums ----
    h, part = pl.pallas_call(
        functools.partial(_gconv_stats_kernel, n_real=N, tile_m=tile_m),
        out_shape=(jax.ShapeDtypeStruct((N_pad, C_pad), jnp.float32),
                   jax.ShapeDtypeStruct((n_tiles, 2, C_pad), jnp.float32)),
        grid=(n_tiles,),
        in_specs=[
            pl.BlockSpec((tile_m, N_pad), lambda i: (i, 0)),     # A row tile (bf16)
            pl.BlockSpec((N_pad, C_pad), lambda i: (0, 0)),      # x, bf16, resident
            pl.BlockSpec((tile_m, C_pad), lambda i: (i, 0)),     # x row tile, f32
            pl.BlockSpec((2 * C_pad, C_pad), lambda i: (0, 0)),  # stacked [W_rel^T; W_root^T]
            pl.BlockSpec((1, C_pad), lambda i: (0, 0)),          # b_rel
        ],
        out_specs=(pl.BlockSpec((tile_m, C_pad), lambda i: (i, 0)),
                   pl.BlockSpec((1, 2, C_pad), lambda i: (i, 0, 0))),
        compiler_params=params,
    )(adj_bf, x_bf, x_f32, w_stack, b_p)

    # ---- tiny glue: reduce per-tile stats, fold gamma into the rsqrt scale ----
    s = jnp.sum(part[:, 0, :], axis=0, keepdims=True)
    ss = jnp.sum(part[:, 1, :], axis=0, keepdims=True)
    mean = s / N
    var = jnp.maximum(ss / N - mean * mean, 0.0)         # biased (training-mode BN)
    scale = gamma_p * jax.lax.rsqrt(var + BN_EPS)        # (1, C_pad)
    shift = beta_p - mean * scale                        # (1, C_pad)

    # ---- pass 2: normalize + relu + skip-connection + relu ----
    out = pl.pallas_call(
        _bn_relu_skip_kernel,
        out_shape=jax.ShapeDtypeStruct((N_pad, C_pad), jnp.float32),
        grid=(n_tiles,),
        in_specs=[pl.BlockSpec((tile_m, C_pad), lambda i: (i, 0)),   # h tile
                  pl.BlockSpec((tile_m, C_pad), lambda i: (i, 0)),   # x tile (identity)
                  pl.BlockSpec((1, C_pad), lambda i: (0, 0)),        # scale
                  pl.BlockSpec((1, C_pad), lambda i: (0, 0))],       # shift
        out_specs=pl.BlockSpec((tile_m, C_pad), lambda i: (i, 0)),
        compiler_params=params,
    )(h, x_f32, scale, shift)

    return out[:N, :C]


def densify(edge_index, edge_weight, num_nodes):
    # A[i, j] = sum of weights of edges j -> i  (PyG aggregates at target = edge_index[1])
    src, dst = edge_index[0], edge_index[1]
    adj = jnp.zeros((num_nodes, num_nodes), jnp.float32)
    return adj.at[dst, src].add(edge_weight)


def reference_forward(adj, x, w_rel, w_root, b_rel, gamma, beta):
    # Mirror the kernel's bf16 quantization of the O(N^2) aggregation operands.
    a_q = adj.astype(jnp.bfloat16).astype(jnp.float32)
    x_q = x.astype(jnp.bfloat16).astype(jnp.float32)
    agg = a_q @ x_q
    h = agg @ w_rel.T + x @ w_root.T + b_rel
    mean = h.mean(axis=0, keepdims=True)
    var = ((h - mean) ** 2).mean(axis=0, keepdims=True)
    h = (h - mean) / jnp.sqrt(var + BN_EPS) * gamma + beta
    h = jnp.maximum(h, 0.0)
    return jnp.maximum(h + x, 0.0)


if __name__ == "__main__":
    key = jax.random.PRNGKey(0)
    N = 16          # graph nodes
    C = 8           # in_channels == out_channels (needed for skip connection)
    E = 32          # edges

    k_x, k_src, k_dst, k_w, k_wrel, k_wroot, k_b, k_g, k_beta = jax.random.split(key, 9)

    x = jax.random.normal(k_x, (N, C), jnp.float32)
    edge_src = jax.random.randint(k_src, (E,), 0, N)
    edge_dst = jax.random.randint(k_dst, (E,), 0, N)
    edge_index = jnp.stack([edge_src, edge_dst], axis=0)          # [2, E]
    edge_weight = jax.random.uniform(k_w, (E,), jnp.float32)

    scale = 1.0 / jnp.sqrt(jnp.float32(C))
    w_rel = jax.random.uniform(k_wrel, (C, C), jnp.float32, -scale, scale)
    w_root = jax.random.uniform(k_wroot, (C, C), jnp.float32, -scale, scale)
    b_rel = jax.random.uniform(k_b, (1, C), jnp.float32, -scale, scale)
    gamma = 1.0 + 0.1 * jax.random.normal(k_g, (1, C), jnp.float32)
    beta = 0.1 * jax.random.normal(k_beta, (1, C), jnp.float32)

    adj = densify(edge_index, edge_weight, N)

    out = gblock_forward(adj, x, w_rel, w_root, b_rel, gamma, beta)
    out = jax.block_until_ready(out)

    ref = reference_forward(adj, x, w_rel, w_root, b_rel, gamma, beta)
    assert out.shape == (N, C)
    assert jnp.allclose(out, ref, atol=5e-4, rtol=5e-4), "mismatch vs reference"

    print("KERNEL_OK")
</pallas_src>

<mosaic_0001>
module attributes {stable_mosaic.version = 11 : i64} {
  func.func @_gconv_stats_kernel(%arg0: i32, %arg1: memref<16x16xbf16, #tpu.memory_space<vmem>>, %arg2: memref<16x128xbf16, #tpu.memory_space<vmem>>, %arg3: memref<16x128xf32, #tpu.memory_space<vmem>>, %arg4: memref<256x128xf32, #tpu.memory_space<vmem>>, %arg5: memref<1x128xf32, #tpu.memory_space<vmem>>, %arg6: memref<16x128xf32, #tpu.memory_space<vmem>>, %arg7: memref<1x2x128xf32, #tpu.memory_space<vmem>>) attributes {dimension_semantics = [#tpu.dimension_semantics<parallel>], iteration_bounds = array<i64: 1>, scalar_prefetch = 0 : i64, scratch_operands = 0 : i64, tpu.core_type = #tpu.core_type<tc>, window_params = [{transform_indices = @transform_0, window_bounds = array<i64: 16, 16>}, {pipeline_mode = #tpu.pipeline_mode<synchronous>, transform_indices = @transform_1, window_bounds = array<i64: 16, 128>}, {transform_indices = @transform_2, window_bounds = array<i64: 16, 128>}, {pipeline_mode = #tpu.pipeline_mode<synchronous>, transform_indices = @transform_3, window_bounds = array<i64: 256, 128>}, {pipeline_mode = #tpu.pipeline_mode<synchronous>, transform_indices = @transform_4, window_bounds = array<i64: 1, 128>}, {transform_indices = @transform_5, window_bounds = array<i64: 16, 128>}, {transform_indices = @transform_6, window_bounds = array<i64: 1, 2, 128>}]} {
    %c0 = arith.constant 0 : index
    %c0_0 = arith.constant 0 : index
    %0 = vector.load %arg1[%c0, %c0_0] : memref<16x16xbf16, #tpu.memory_space<vmem>>, vector<16x16xbf16>
    %c0_1 = arith.constant 0 : index
    %c0_2 = arith.constant 0 : index
    %1 = vector.load %arg2[%c0_1, %c0_2] : memref<16x128xbf16, #tpu.memory_space<vmem>>, vector<16x128xbf16>
    %cst = arith.constant dense<0.000000e+00> : vector<16x128xf32>
    %2 = tpu.matmul %0, %1, %cst {dimension_numbers = #tpu.dot_dimension_numbers<[1], [0], [0], [1], [0, 0, 1, 1], [], []>} : vector<16x16xbf16>, vector<16x128xbf16>, vector<16x128xf32> -> vector<16x128xf32>
    %c0_3 = arith.constant 0 : index
    %c0_4 = arith.constant 0 : index
    %3 = vector.load %arg3[%c0_3, %c0_4] : memref<16x128xf32, #tpu.memory_space<vmem>>, vector<16x128xf32>
    %4 = tpu.concatenate %2, %3 in 1 : vector<16x128xf32>, vector<16x128xf32> -> vector<16x256xf32>
    %c0_5 = arith.constant 0 : index
    %c0_6 = arith.constant 0 : index
    %5 = vector.load %arg4[%c0_5, %c0_6] : memref<256x128xf32, #tpu.memory_space<vmem>>, vector<256x128xf32>
    %cst_7 = arith.constant dense<0.000000e+00> : vector<16x128xf32>
    %6 = tpu.matmul %4, %5, %cst_7 {dimension_numbers = #tpu.dot_dimension_numbers<[1], [0], [0], [1], [0, 0, 1, 1], [], []>} : vector<16x256xf32>, vector<256x128xf32>, vector<16x128xf32> -> vector<16x128xf32>
    %c0_8 = arith.constant 0 : index
    %c0_9 = arith.constant 0 : index
    %7 = vector.load %arg5[%c0_8, %c0_9] : memref<1x128xf32, #tpu.memory_space<vmem>>, vector<1x128xf32>
    %8 = vector.broadcast %7 : vector<1x128xf32> to vector<16x128xf32>
    %9 = arith.addf %6, %8 : vector<16x128xf32>
    %c0_10 = arith.constant 0 : index
    %c0_11 = arith.constant 0 : index
    %10 = vector.load %arg6[%c0_10, %c0_11] : memref<16x128xf32, #tpu.memory_space<vmem>>, vector<16x128xf32>
    tpu.vector_store %arg6[%c0_10, %c0_11], %9 {strides = array<i32>} : memref<16x128xf32, #tpu.memory_space<vmem>>, vector<16x128xf32>,
    %c16_i32 = arith.constant 16 : i32
    %11 = arith.muli %arg0, %c16_i32 : i32
    %12 = tpu.iota {dimensions = array<i32: 0>} : vector<16x128xi32>
    %13 = vector.broadcast %11 : i32 to vector<16x128xi32>
    %14 = arith.addi %12, %13 : vector<16x128xi32>
    %c16_i32_12 = arith.constant 16 : i32
    %15 = vector.broadcast %c16_i32_12 : i32 to vector<16x128xi32>
    %16 = arith.cmpi slt, %14, %15 : vector<16x128xi32>
    %cst_13 = arith.constant 0.000000e+00 : f32
    %17 = vector.broadcast %cst_13 : f32 to vector<16x128xf32>
    %18 = arith.select %16, %9, %17 : vector<16x128xi1>, vector<16x128xf32>
    %cst_14 = arith.constant dense<0.000000e+00> : vector<128xf32>
    %19 = vector.multi_reduction <add>, %18, %cst_14 [0] : vector<16x128xf32> to vector<128xf32>
    %20 = vector.shape_cast %19 : vector<128xf32> to vector<1x128xf32>
    %21 = arith.mulf %18, %18 : vector<16x128xf32>
    %cst_15 = arith.constant dense<0.000000e+00> : vector<128xf32>
    %22 = vector.multi_reduction <add>, %21, %cst_15 [0] : vector<16x128xf32> to vector<128xf32>
    %23 = vector.shape_cast %22 : vector<128xf32> to vector<1x128xf32>
    %24 = tpu.concatenate %20, %23 in 0 : vector<1x128xf32>, vector<1x128xf32> -> vector<2x128xf32>
    %25 = vector.shape_cast %24 : vector<2x128xf32> to vector<1x2x128xf32>
    %c0_16 = arith.constant 0 : index
    %c0_17 = arith.constant 0 : index
    %c0_18 = arith.constant 0 : index
    %26 = vector.load %arg7[%c0_16, %c0_17, %c0_18] : memref<1x2x128xf32, #tpu.memory_space<vmem>>, vector<1x2x128xf32>
    tpu.vector_store %arg7[%c0_16, %c0_17, %c0_18], %25 {strides = array<i32>} : memref<1x2x128xf32, #tpu.memory_space<vmem>>, vector<1x2x128xf32>,
    return
  }
  func.func @transform_0(%arg0: i32) -> (i32, i32) {
    %c0_i32 = arith.constant 0 : i32
    %c0_i32_0 = arith.constant 0 : i32
    return %arg0, %c0_i32 : i32, i32
  }
  func.func @transform_1(%arg0: i32) -> (i32, i32) {
    %c0_i32 = arith.constant 0 : i32
    %c0_i32_0 = arith.constant 0 : i32
    %c0_i32_1 = arith.constant 0 : i32
    return %c0_i32, %c0_i32_0 : i32, i32
  }
  func.func @transform_2(%arg0: i32) -> (i32, i32) {
    %c0_i32 = arith.constant 0 : i32
    %c0_i32_0 = arith.constant 0 : i32
    return %arg0, %c0_i32 : i32, i32
  }
  func.func @transform_3(%arg0: i32) -> (i32, i32) {
    %c0_i32 = arith.constant 0 : i32
    %c0_i32_0 = arith.constant 0 : i32
    %c0_i32_1 = arith.constant 0 : i32
    return %c0_i32, %c0_i32_0 : i32, i32
  }
  func.func @transform_4(%arg0: i32) -> (i32, i32) {
    %c0_i32 = arith.constant 0 : i32
    %c0_i32_0 = arith.constant 0 : i32
    %c0_i32_1 = arith.constant 0 : i32
    return %c0_i32, %c0_i32_0 : i32, i32
  }
  func.func @transform_5(%arg0: i32) -> (i32, i32) {
    %c0_i32 = arith.constant 0 : i32
    %c0_i32_0 = arith.constant 0 : i32
    return %arg0, %c0_i32 : i32, i32
  }
  func.func @transform_6(%arg0: i32) -> (i32, i32, i32) {
    %c0_i32 = arith.constant 0 : i32
    %c0_i32_0 = arith.constant 0 : i32
    %c0_i32_1 = arith.constant 0 : i32
    return %arg0, %c0_i32, %c0_i32_0 : i32, i32, i32
  }
}

</mosaic_0001>

<llo_original>
// kernel: tpu_custom_call.1
$region0: #{tpu_custom_call.1}
  #allocation0 [shape = 'u32[]', space=smem, size = 0x4, offset = 0x4, fixed_abs, tag = 'smem constant byte address 0x4 - core index']
  #allocation1 [shape = 'u32[72,128]{1,0:T(1,128)}', space=vmem, size = 0x9000, scoped, tag = 'internal scratch']
  %s0 = inlined_call_operand.hbm [shape: bf16[16,16], index: 0, kind: input, shape index: {}]
  %s1 = inlined_call_operand.hbm [shape: bf16[16,128], index: 1, kind: input, shape index: {}]
  %s2 = inlined_call_operand.hbm [shape: f32[16,128], index: 2, kind: input, shape index: {}]
  %s3 = inlined_call_operand.hbm [shape: f32[256,128], index: 3, kind: input, shape index: {}]
  %s4 = inlined_call_operand.vmem [shape: f32[1,128], index: 4, kind: input, shape index: {}]
  %s5 = inlined_call_operand.hbm [shape: f32[16,128], index: 5, kind: output, shape index: {0}]
  %s6 = inlined_call_operand.hbm [shape: f32[1,2,128], index: 6, kind: output, shape index: {1}]
  %7 = xla_tuple %s5, %s6
  %s8 = sld [smem:[#allocation0]]
  $region54: #{tpu_custom_call.1} parent=0
    _
  %s10 = ssub.s32 1, %s8
  %s11 = scalar_select 0, %s10, %s8
  $region1: #{tpu_custom_call.1} parent=0
    #allocation2 [shape = 'u8[4096]{0}', space=vmem, size = 0x1000, scoped, tag = 'input window, operand 0, single buffered']
    #allocation3 [shape = 's32[1]{0}', space=sflag, size = 0x4, scoped, tag = 'scoped memory for tpu_custom_call.1']
    #allocation4 [shape = 's32[1]{0}', space=sflag, size = 0x4, scoped, tag = 'scoped memory for tpu_custom_call.1']
    #allocation5 [shape = 'u8[4096]{0}', space=vmem, size = 0x1000, scoped, tag = 'input window, operand 1, single buffered']
    #allocation6 [shape = 's32[1]{0}', space=sflag, size = 0x4, scoped, tag = 'scoped memory for tpu_custom_call.1']
    #allocation7 [shape = 'u8[8192]{0}', space=vmem, size = 0x2000, scoped, tag = 'input window, operand 2, single buffered']
    #allocation8 [shape = 'u8[131072]{0}', space=vmem, size = 0x20000, scoped, tag = 'input window, operand 3, single buffered']
    #allocation9 [shape = 's32[1]{0}', space=sflag, size = 0x4, scoped, tag = 'scoped memory for tpu_custom_call.1']
    #allocation10 [shape = 'u8[8192]{0}', space=vmem, size = 0x2000, scoped, tag = 'output window, operand 0, single buffered']
    #allocation11 [shape = 'u8[1024]{0}', space=vmem, size = 0x400, scoped, tag = 'output window, operand 1, single buffered']
    #allocation12 [shape = 's32[1]{0}', space=sflag, size = 0x4, scoped, tag = 'scoped memory for tpu_custom_call.1']
    %12 = vsyncpa [#allocation3], 0
    %13 = vsyncpa [#allocation6], 0
    %14 = vsyncpa [#allocation9], 0
    %15 = vsyncpa [#allocation4], 0
    %16 = vsyncpa [#allocation12], 0
    // Predicated region
    $region2: #{tpu_custom_call.1} parent=1 // pred_check
      _
    $region3: #{tpu_custom_call.1} parent=1 // pred_check_branch
      %18 = sbr.rel (0) target = $region5
    $region4: #{tpu_custom_call.1} parent=1 // pred_region
      %20 = vsyncadd [#allocation3], 0
      %s21 = sshll.u32 %s0, 4
      %s22 = int_to_ptr.hbm [resolvable:$true] %s21
      %s23 = sshll.u32 [#allocation2], 4
      %s24 = int_to_ptr.vmem [resolvable:$true] %s23
      %29 = dma.hbm_to_vmem [thread:$0]  %s22, 128, %s24, [#allocation3], 64, 64, 4
    $region5: #{tpu_custom_call.1} parent=1 // pred_fallthru
      _
    // Predicated region
    $region6: #{tpu_custom_call.1} parent=1 // pred_check
      _
    $region7: #{tpu_custom_call.1} parent=1 // pred_check_branch
      %31 = sbr.rel (0) target = $region9
    $region8: #{tpu_custom_call.1} parent=1 // pred_region
      %33 = vsyncadd [#allocation6], 0
      %s34 = sshll.u32 %s1, 4
      %s35 = int_to_ptr.hbm [resolvable:$true] %s34
      %s36 = sshll.u32 [#allocation5], 4
      %s37 = int_to_ptr.vmem [resolvable:$true] %s36
      %42 = dma.hbm_to_vmem [thread:$0]  %s35, 128, %s37, [#allocation6], 64, 64, 4
    $region9: #{tpu_custom_call.1} parent=1 // pred_fallthru
      _
    // Predicated region
    $region10: #{tpu_custom_call.1} parent=1 // pred_check
      _
    $region11: #{tpu_custom_call.1} parent=1 // pred_check_branch
      %44 = sbr.rel (0) target = $region13
    $region12: #{tpu_custom_call.1} parent=1 // pred_region
      %46 = vsyncadd [#allocation6], 0
      %s47 = sshll.u32 %s2, 4
      %s48 = int_to_ptr.hbm [resolvable:$true] %s47
      %s49 = sshll.u32 [#allocation7], 4
      %s50 = int_to_ptr.vmem [resolvable:$true] %s49
      %55 = dma.hbm_to_vmem [thread:$0]  %s48, 256, %s50, [#allocation6], 128, 128, 8
    $region13: #{tpu_custom_call.1} parent=1 // pred_fallthru
      _
    // Predicated region
    $region14: #{tpu_custom_call.1} parent=1 // pred_check
      _
    $region15: #{tpu_custom_call.1} parent=1 // pred_check_branch
      %57 = sbr.rel (0) target = $region17
    $region16: #{tpu_custom_call.1} parent=1 // pred_region
      %59 = vsyncadd [#allocation9], 0
      %s60 = sshll.u32 %s3, 4
      %s61 = int_to_ptr.hbm [resolvable:$true] %s60
      %s62 = sshll.u32 [#allocation8], 4
      %s63 = int_to_ptr.vmem [resolvable:$true] %s62
      %68 = dma.hbm_to_vmem [thread:$0]  %s61, 4096, %s63, [#allocation9], 128, 128, 8
    $region17: #{tpu_custom_call.1} parent=1 // pred_fallthru
      _
    // Predicated region
    $region18: #{tpu_custom_call.1} parent=1 // pred_check
      _
    $region19: #{tpu_custom_call.1} parent=1 // pred_check_branch
      %70 = sbr.rel (0) target = $region21
    $region20: #{tpu_custom_call.1} parent=1 // pred_region
      _
    $region21: #{tpu_custom_call.1} parent=1 // pred_fallthru
      _
    // Predicated region
    $region22: #{tpu_custom_call.1} parent=1 // pred_check
      _
    $region23: #{tpu_custom_call.1} parent=1 // pred_check_branch
      %72 = sbr.rel (0) target = $region25
    $region24: #{tpu_custom_call.1} parent=1 // pred_region
      %74 = dma.done [#allocation3], 128
    $region25: #{tpu_custom_call.1} parent=1 // pred_fallthru
      _
    // Predicated region
    $region26: #{tpu_custom_call.1} parent=1 // pred_check
      _
    $region27: #{tpu_custom_call.1} parent=1 // pred_check_branch
      %76 = sbr.rel (0) target = $region29
    $region28: #{tpu_custom_call.1} parent=1 // pred_region
      %78 = dma.done [#allocation6], 128
    $region29: #{tpu_custom_call.1} parent=1 // pred_fallthru
      _
    // Predicated region
    $region30: #{tpu_custom_call.1} parent=1 // pred_check
      _
    $region31: #{tpu_custom_call.1} parent=1 // pred_check_branch
      %80 = sbr.rel (0) target = $region33
    $region32: #{tpu_custom_call.1} parent=1 // pred_region
      %82 = dma.done [#allocation6], 256
    $region33: #{tpu_custom_call.1} parent=1 // pred_fallthru
      _
    // Predicated region
    $region34: #{tpu_custom_call.1} parent=1 // pred_check
      _
    $region35: #{tpu_custom_call.1} parent=1 // pred_check_branch
      %84 = sbr.rel (0) target = $region37
    $region36: #{tpu_custom_call.1} parent=1 // pred_region
      %86 = dma.done [#allocation9], 4096
    $region37: #{tpu_custom_call.1} parent=1 // pred_fallthru
      _
    %v88 = vld [vmem:[#allocation2] sm:$0xf]
    %v89 = vld [vmem:[#allocation2 + $0x4] sm:$0xf]
    %v90 = vld [vmem:[#allocation5] sm:$0xf]
    %v91 = vld [vmem:[#allocation5 + $0x4] sm:$0xf]
    %v94 = vunpack.c.l.b16 %v88
    %v95 = vunpack.c.l.b16 %v89
    %v96 = vpack.c.b16 %v95, %v94
    %v99 = vunpack.c.l.b16 %v90
    %v100 = vunpack.c.l.b16 %v91
    %v101 = vpack.c.b16 %v100, %v99
    %vm103 = vcmask 130048
    %v105 = vsel %vm103, %v96, 0
    %107 = vmatpush.bf16.msra.mxu0 0
    %108 = vmatpush.bf16.msra.mxu0 0
    %109 = vmatpush.bf16.msra.mxu0 0
    %110 = vmatpush.bf16.msra.mxu0 0
    %111 = vmatpush.bf16.msra.mxu0 0
    %112 = vmatpush.bf16.msra.mxu0 0
    %113 = vmatpush.bf16.msra.mxu0 0
    %114 = vmatpush.bf16.msra.mxu0 %v101
    %115 = vmatmul.bf16.gmra.mxu0 %v105
    %v116 = vpop.f32.mrf.mxu0
    %v117 = vadd.f32 0.0, %v116
    %v118 = vpop.f32.mrf.mxu0
    %v119 = vadd.f32 0.0, %v118
    %120 = vdwg.mxu0
    %v121 = vld [vmem:[#allocation7] sm:$0xff]
    %v122 = vld [vmem:[#allocation7 + $0x8] sm:$0xff]
    %v123 = vld [vmem:[#allocation8] sm:$0xff]
    %v124 = vld [vmem:[#allocation8 + $0x8] sm:$0xff]
    %v125 = vld [vmem:[#allocation8 + $0x10] sm:$0xff]
    %v126 = vld [vmem:[#allocation8 + $0x18] sm:$0xff]
    %v127 = vld [vmem:[#allocation8 + $0x20] sm:$0xff]
    %v128 = vld [vmem:[#allocation8 + $0x28] sm:$0xff]
    %v129 = vld [vmem:[#allocation8 + $0x30] sm:$0xff]
    %v130 = vld [vmem:[#allocation8 + $0x38] sm:$0xff]
    %v131 = vld [vmem:[#allocation8 + $0x40] sm:$0xff]
    %v132 = vld [vmem:[#allocation8 + $0x48] sm:$0xff]
    %v133 = vld [vmem:[#allocation8 + $0x50] sm:$0xff]
    %v134 = vld [vmem:[#allocation8 + $0x58] sm:$0xff]
    %v135 = vld [vmem:[#allocation8 + $0x60] sm:$0xff]
    %v136 = vld [vmem:[#allocation8 + $0x68] sm:$0xff]
    %v137 = vld [vmem:[#allocation8 + $0x70] sm:$0xff]
    %v138 = vld [vmem:[#allocation8 + $0x78] sm:$0xff]
    %v139 = vld [vmem:[#allocation8 + $0x80] sm:$0xff]
    %v140 = vld [vmem:[#allocation8 + $0x88] sm:$0xff]
    %v141 = vld [vmem:[#allocation8 + $0x90] sm:$0xff]
    %v142 = vld [vmem:[#allocation8 + $0x98] sm:$0xff]
    %v143 = vld [vmem:[#allocation8 + $0xa0] sm:$0xff]
    %v144 = vld [vmem:[#allocation8 + $0xa8] sm:$0xff]
    %v145 = vld [vmem:[#allocation8 + $0xb0] sm:$0xff]
    %v146 = vld [vmem:[#allocation8 + $0xb8] sm:$0xff]
    %v147 = vld [vmem:[#allocation8 + $0xc0] sm:$0xff]
    %v148 = vld [vmem:[#allocation8 + $0xc8] sm:$0xff]
    %v149 = vld [vmem:[#allocation8 + $0xd0] sm:$0xff]
    %v150 = vld [vmem:[#allocation8 + $0xd8] sm:$0xff]
    %v151 = vld [vmem:[#allocation8 + $0xe0] sm:$0xff]
    %v152 = vld [vmem:[#allocation8 + $0xe8] sm:$0xff]
    %v153 = vld [vmem:[#allocation8 + $0xf0] sm:$0xff]
    %v154 = vld [vmem:[#allocation8 + $0xf8] sm:$0xff]
    %v155 = vld [vmem:[%s4] sm:$0x1]
    %v157 = vperm.slane %v155, 0
    %159 = vmatpush.msra.mxu0 %v138
    %160 = vmatpush.msra.mxu0 %v137
    %161 = vmatpush.msra.mxu0 %v136
    %162 = vmatpush.msra.mxu0 %v135
    %163 = vmatpush.msra.mxu0 %v134
    %164 = vmatpush.msra.mxu0 %v133
    %165 = vmatpush.msra.mxu0 %v132
    %166 = vmatpush.msra.mxu0 %v131
    %167 = vmatpush.msra.mxu0 %v130
    %168 = vmatpush.msra.mxu0 %v129
    %169 = vmatpush.msra.mxu0 %v128
    %170 = vmatpush.msra.mxu0 %v127
    %171 = vmatpush.msra.mxu0 %v126
    %172 = vmatpush.msra.mxu0 %v125
    %173 = vmatpush.msra.mxu0 %v124
    %174 = vmatpush.msra.mxu0 %v123
    %175 = vmatmul.f32.gmra.mxu0 %v117
    %v176 = vpop.f32.mrf.mxu0
    %v177 = vadd.f32 %v157, %v176
    %178 = vmatmul.f32.gmra.mxu0 %v119
    %v179 = vpop.f32.mrf.mxu0
    %v180 = vadd.f32 %v157, %v179
    %181 = vdwg.mxu0
    %182 = vmatpush.msra.mxu0 %v154
    %183 = vmatpush.msra.mxu0 %v153
    %184 = vmatpush.msra.mxu0 %v152
    %185 = vmatpush.msra.mxu0 %v151
    %186 = vmatpush.msra.mxu0 %v150
    %187 = vmatpush.msra.mxu0 %v149
    %188 = vmatpush.msra.mxu0 %v148
    %189 = vmatpush.msra.mxu0 %v147
    %190 = vmatpush.msra.mxu0 %v146
    %191 = vmatpush.msra.mxu0 %v145
    %192 = vmatpush.msra.mxu0 %v144
    %193 = vmatpush.msra.mxu0 %v143
    %194 = vmatpush.msra.mxu0 %v142
    %195 = vmatpush.msra.mxu0 %v141
    %196 = vmatpush.msra.mxu0 %v140
    %197 = vmatpush.msra.mxu0 %v139
    %198 = vmatmul.f32.gmra.mxu0 %v121
    %v199 = vpop.f32.mrf.mxu0
    %v200 = vadd.f32 %v177, %v199
    %201 = vmatmul.f32.gmra.mxu0 %v122
    %v202 = vpop.f32.mrf.mxu0
    %v203 = vadd.f32 %v180, %v202
    %204 = vdwg.mxu0
    %205 = vst [vmem:[#allocation10] sm:$0xff] %v200
    %206 = vst [vmem:[#allocation10 + $0x8] sm:$0xff] %v203
    %s207 = smul.u32 0, 16
    %v208 = vlaneseq
    %v209 = vshrl.u32 %v208, 7
    %v210 = vadd.s32 %v209, 8
    %v211 = vstv %s207
    %v212 = vadd.s32 %v209, %v211
    %v213 = vadd.s32 %v210, %v211
    %vm214 = vcmp.lt.s32.totalorder %v212, 16
    %vm215 = vcmp.lt.s32.totalorder %v213, 16
    %v216 = vsel %vm214, %v200, 0.0
    %v217 = vsel %vm215, %v203, 0.0
    %v218 = vadd.f32 %v216, %v217
    %v219 = vrot.slane %v218, 4
    %v220 = vadd.f32 %v218, %v219
    %v221 = vrot.slane %v220, 2
    %v222 = vadd.f32 %v220, %v221
    %v223 = vrot.slane %v222, 1
    %v224 = vadd.f32 %v222, %v223
    %v225 = vmul.f32 %v216, %v216
    %v226 = vmul.f32 %v217, %v217
    %v227 = vadd.f32 %v225, %v226
    %v228 = vrot.slane %v227, 4
    %v229 = vadd.f32 %v227, %v228
    %v230 = vrot.slane %v229, 2
    %v231 = vadd.f32 %v229, %v230
    %v232 = vrot.slane %v231, 1
    %v233 = vadd.f32 %v231, %v232
    %vm234 = vcmask 1040384
    %v235 = vsel %vm234, %v224, %v233
    %236 = vst [vmem:[#allocation11] sm:$0x3] %v235
    // Predicated region
    $region38: #{tpu_custom_call.1} parent=1 // pred_check
      _
    $region39: #{tpu_custom_call.1} parent=1 // pred_check_branch
      %238 = sbr.rel (0) target = $region41
    $region40: #{tpu_custom_call.1} parent=1 // pred_region
      %240 = vsyncadd [#allocation4], 0
      %s241 = sshll.u32 [#allocation10], 4
      %s242 = int_to_ptr.vmem [resolvable:$true] %s241
      %s243 = sshll.u32 %s5, 4
      %s244 = int_to_ptr.hbm [resolvable:$true] %s243
      %249 = dma.vmem_to_hbm [thread:$0]  %s242, 256, %s244, [#allocation4], 128, 128, 8
    $region41: #{tpu_custom_call.1} parent=1 // pred_fallthru
      _
    // Predicated region
    $region42: #{tpu_custom_call.1} parent=1 // pred_check
      _
    $region43: #{tpu_custom_call.1} parent=1 // pred_check_branch
      %251 = sbr.rel (0) target = $region45
    $region44: #{tpu_custom_call.1} parent=1 // pred_region
      %253 = vsyncadd [#allocation12], 0
      %s255 = sshll.u32 [#allocation11], 4
      %s256 = int_to_ptr.vmem [resolvable:$true] %s255
      %s257 = sshll.u32 %s6, 4
      %s258 = int_to_ptr.hbm [resolvable:$true] %s257
      %260 = dma.vmem_to_hbm [thread:$0]  %s256, 32, %s258, [#allocation12]
    $region45: #{tpu_custom_call.1} parent=1 // pred_fallthru
      _
    // Predicated region
    $region46: #{tpu_custom_call.1} parent=1 // pred_check
      _
    $region47: #{tpu_custom_call.1} parent=1 // pred_check_branch
      %262 = sbr.rel (0) target = $region49
    $region48: #{tpu_custom_call.1} parent=1 // pred_region
      %264 = dma.done [#allocation4], 256
    $region49: #{tpu_custom_call.1} parent=1 // pred_fallthru
      _
    // Predicated region
    $region50: #{tpu_custom_call.1} parent=1 // pred_check
      _
    $region51: #{tpu_custom_call.1} parent=1 // pred_check_branch
      %266 = sbr.rel (0) target = $region53
    $region52: #{tpu_custom_call.1} parent=1 // pred_region
      %268 = dma.done [#allocation12], 32
    $region53: #{tpu_custom_call.1} parent=1 // pred_fallthru
      _
    %269 = vsyncpa [#allocation3], 1
    %270 = vsyncpa [#allocation6], 1
    %271 = vsyncpa [#allocation9], 1
    %272 = vsyncpa [#allocation4], 1
    %273 = vsyncpa [#allocation12], 1

</llo_original>
